<compile_context>
chip_gen: v7x
topology: tpu7x:2x2x1
jax: 0.10.0
libtpu: 0.0.40
codegen_flags: <defaults>
</compile_context>

<pallas_src>
import functools

import jax
import jax.numpy as jnp
from jax import lax
from jax.experimental import pallas as pl
from jax.experimental.pallas import tpu as pltpu


def _round_up(x, m):
    return (x + m - 1) // m * m


def bow_encoder_kernel(tok_ref, emb_ref, out_ref, *, block_b, seq_len):
    # tok_ref : (B, S)        int32  in SMEM (scalar-prefetch, whole array)
    # emb_ref : (V, Ep)       float32 in VMEM (lane-padded embedding table)
    # out_ref : (block_b, Ep) float32 (this grid step's batch tile, lane-dense)
    i = pl.program_id(0)

    def row_body(b, carry):
        r = i * block_b + b  # global batch row handled by this iteration

        def tok_body(s, acc):
            t = tok_ref[r, s]                                  # scalar from SMEM
            return jnp.maximum(acc, emb_ref[pl.ds(t, 1), :])   # gather + max

        acc0 = emb_ref[pl.ds(tok_ref[r, 0], 1), :]             # (1, Ep)
        acc = lax.fori_loop(1, seq_len, tok_body, acc0, unroll=True)
        out_ref[pl.ds(b, 1), :] = acc
        return carry

    lax.fori_loop(0, block_b, row_body, 0)


def bow_encoder(tokens, embedding, *, block_b=None):
    """tokens: (B, S) int, embedding: (V, E) float32 -> (B, E) float32."""
    B, S = tokens.shape
    V, E = embedding.shape

    # Lane-dense layout: pad the feature dim up to a multiple of 128 so both
    # the gathered rows and the output stores are full-lane (unmasked vst).
    Ep = _round_up(E, 128)
    emb_p = jnp.pad(embedding.astype(jnp.float32), ((0, 0), (0, Ep - E)))
    tok = tokens.astype(jnp.int32)

    # Batch rows per grid step.  Either a multiple of 8 (64) or the full batch,
    # satisfying the (8,128) block constraint; B % block_b == 0 in all cases.
    if block_b is None:
        block_b = 64 if (B > 64 and B % 64 == 0) else B
    assert B % block_b == 0, (B, block_b)

    kernel = functools.partial(bow_encoder_kernel, block_b=block_b, seq_len=S)

    out = pl.pallas_call(
        kernel,
        out_shape=jax.ShapeDtypeStruct((B, Ep), jnp.float32),
        grid_spec=pltpu.PrefetchScalarGridSpec(
            num_scalar_prefetch=1,               # tokens -> SMEM
            grid=(B // block_b,),
            in_specs=[
                # Full embedding table, VMEM-resident; constant index_map so it
                # is only DMA'd once per core.
                pl.BlockSpec((V, Ep), lambda i, tok: (0, 0)),
            ],
            out_specs=pl.BlockSpec((block_b, Ep), lambda i, tok: (i, 0)),
        ),
        compiler_params=pltpu.CompilerParams(
            dimension_semantics=("parallel",)),
    )(tok, emb_p)
    return out[:, :E]


def init_bow_encoder_params(key, vocab_size, emb_size):
    # Matches nn.init.uniform_(-0.1, 0.1) + zeroing of the padding row 0.
    emb = jax.random.uniform(key, (vocab_size, emb_size),
                             dtype=jnp.float32, minval=-0.1, maxval=0.1)
    emb = emb.at[0].set(0.0)
    return emb


if __name__ == "__main__":
    vocab_size = 64
    emb_size = 32
    hidden_size = 32   # unused in forward (as in the PyTorch module)
    batch = 2
    seq_len = 8

    root = jax.random.PRNGKey(0)
    k_emb, k_tok = jax.random.split(root)

    embedding = init_bow_encoder_params(k_emb, vocab_size, emb_size)
    tokens = jax.random.randint(k_tok, (batch, seq_len), 0, vocab_size,
                                dtype=jnp.int32)

    encoding = jax.block_until_ready(bow_encoder(tokens, embedding))

    # Pure-JAX reference: embedding lookup -> (identity dropout) -> max over seq.
    ref = jnp.max(jnp.take(embedding, tokens, axis=0), axis=1)

    assert encoding.shape == (batch, emb_size), encoding.shape
    assert jnp.allclose(encoding, ref, atol=1e-6), "mismatch vs reference"

    print("KERNEL_OK")
</pallas_src>

<mosaic_0001>
module attributes {stable_mosaic.version = 11 : i64} {
  func.func @bow_encoder_kernel(%arg0: i32, %arg1: memref<2x8xi32, #tpu.memory_space<smem>>, %arg2: memref<64x128xf32, #tpu.memory_space<vmem>>, %arg3: memref<2x128xf32, #tpu.memory_space<vmem>>) attributes {dimension_semantics = [#tpu.dimension_semantics<parallel>], iteration_bounds = array<i64: 1>, scalar_prefetch = 1 : i64, scratch_operands = 0 : i64, tpu.core_type = #tpu.core_type<tc>, window_params = [{pipeline_mode = #tpu.pipeline_mode<synchronous>, transform_indices = @transform_0, window_bounds = array<i64: 64, 128>}, {transform_indices = @transform_1, window_bounds = array<i64: 2, 128>}]} {
    %c0_i32 = arith.constant 0 : i32
    %c2_i32 = arith.constant 2 : i32
    %0 = arith.addi %c0_i32, %c2_i32 : i32
    %c1_i32 = arith.constant 1 : i32
    scf.for %arg4 = %c0_i32 to %0 step %c1_i32  : i32 {
      %c2_i32_1 = arith.constant 2 : i32
      %1 = arith.muli %arg0, %c2_i32_1 : i32
      %2 = arith.addi %1, %arg4 : i32
      %3 = arith.index_cast %2 : i32 to index
      %c0 = arith.constant 0 : index
      %4 = memref.load %arg1[%3, %c0] : memref<2x8xi32, #tpu.memory_space<smem>>
      %5 = arith.index_cast %4 : i32 to index
      %c0_2 = arith.constant 0 : index
      %6 = vector.load %arg2[%5, %c0_2] : memref<64x128xf32, #tpu.memory_space<vmem>>, vector<1x128xf32>
      %c1_i32_3 = arith.constant 1 : i32
      %7 = arith.index_cast %2 : i32 to index
      %8 = arith.index_cast %c1_i32_3 : i32 to index
      %9 = memref.load %arg1[%7, %8] : memref<2x8xi32, #tpu.memory_space<smem>>
      %10 = arith.index_cast %9 : i32 to index
      %c0_4 = arith.constant 0 : index
      %11 = vector.load %arg2[%10, %c0_4] : memref<64x128xf32, #tpu.memory_space<vmem>>, vector<1x128xf32>
      %12 = arith.maximumf %6, %11 : vector<1x128xf32>
      %c2_i32_5 = arith.constant 2 : i32
      %13 = arith.index_cast %2 : i32 to index
      %14 = arith.index_cast %c2_i32_5 : i32 to index
      %15 = memref.load %arg1[%13, %14] : memref<2x8xi32, #tpu.memory_space<smem>>
      %16 = arith.index_cast %15 : i32 to index
      %c0_6 = arith.constant 0 : index
      %17 = vector.load %arg2[%16, %c0_6] : memref<64x128xf32, #tpu.memory_space<vmem>>, vector<1x128xf32>
      %18 = arith.maximumf %12, %17 : vector<1x128xf32>
      %c3_i32 = arith.constant 3 : i32
      %19 = arith.index_cast %2 : i32 to index
      %20 = arith.index_cast %c3_i32 : i32 to index
      %21 = memref.load %arg1[%19, %20] : memref<2x8xi32, #tpu.memory_space<smem>>
      %22 = arith.index_cast %21 : i32 to index
      %c0_7 = arith.constant 0 : index
      %23 = vector.load %arg2[%22, %c0_7] : memref<64x128xf32, #tpu.memory_space<vmem>>, vector<1x128xf32>
      %24 = arith.maximumf %18, %23 : vector<1x128xf32>
      %c4_i32 = arith.constant 4 : i32
      %25 = arith.index_cast %2 : i32 to index
      %26 = arith.index_cast %c4_i32 : i32 to index
      %27 = memref.load %arg1[%25, %26] : memref<2x8xi32, #tpu.memory_space<smem>>
      %28 = arith.index_cast %27 : i32 to index
      %c0_8 = arith.constant 0 : index
      %29 = vector.load %arg2[%28, %c0_8] : memref<64x128xf32, #tpu.memory_space<vmem>>, vector<1x128xf32>
      %30 = arith.maximumf %24, %29 : vector<1x128xf32>
      %c5_i32 = arith.constant 5 : i32
      %31 = arith.index_cast %2 : i32 to index
      %32 = arith.index_cast %c5_i32 : i32 to index
      %33 = memref.load %arg1[%31, %32] : memref<2x8xi32, #tpu.memory_space<smem>>
      %34 = arith.index_cast %33 : i32 to index
      %c0_9 = arith.constant 0 : index
      %35 = vector.load %arg2[%34, %c0_9] : memref<64x128xf32, #tpu.memory_space<vmem>>, vector<1x128xf32>
      %36 = arith.maximumf %30, %35 : vector<1x128xf32>
      %c6_i32 = arith.constant 6 : i32
      %37 = arith.index_cast %2 : i32 to index
      %38 = arith.index_cast %c6_i32 : i32 to index
      %39 = memref.load %arg1[%37, %38] : memref<2x8xi32, #tpu.memory_space<smem>>
      %40 = arith.index_cast %39 : i32 to index
      %c0_10 = arith.constant 0 : index
      %41 = vector.load %arg2[%40, %c0_10] : memref<64x128xf32, #tpu.memory_space<vmem>>, vector<1x128xf32>
      %42 = arith.maximumf %36, %41 : vector<1x128xf32>
      %c7_i32 = arith.constant 7 : i32
      %43 = arith.index_cast %2 : i32 to index
      %44 = arith.index_cast %c7_i32 : i32 to index
      %45 = memref.load %arg1[%43, %44] : memref<2x8xi32, #tpu.memory_space<smem>>
      %46 = arith.index_cast %45 : i32 to index
      %c0_11 = arith.constant 0 : index
      %47 = vector.load %arg2[%46, %c0_11] : memref<64x128xf32, #tpu.memory_space<vmem>>, vector<1x128xf32>
      %48 = arith.maximumf %42, %47 : vector<1x128xf32>
      %c7_i32_12 = arith.constant 7 : i32
      %49 = arith.index_cast %arg4 : i32 to index
      %c0_13 = arith.constant 0 : index
      %50 = vector.load %arg3[%49, %c0_13] : memref<2x128xf32, #tpu.memory_space<vmem>>, vector<1x128xf32>
      tpu.vector_store %arg3[%49, %c0_13], %48 {strides = array<i32>} : memref<2x128xf32, #tpu.memory_space<vmem>>, vector<1x128xf32>,
    }
    %c2_i32_0 = arith.constant 2 : i32
    return
  }
  func.func @transform_0(%arg0: i32, %arg1: memref<2x8xi32, #tpu.memory_space<smem>>) -> (i32, i32) {
    %c0_i32 = arith.constant 0 : i32
    %c0_i32_0 = arith.constant 0 : i32
    %c0_i32_1 = arith.constant 0 : i32
    return %c0_i32, %c0_i32_0 : i32, i32
  }
  func.func @transform_1(%arg0: i32, %arg1: memref<2x8xi32, #tpu.memory_space<smem>>) -> (i32, i32) {
    %c0_i32 = arith.constant 0 : i32
    %c0_i32_0 = arith.constant 0 : i32
    return %arg0, %c0_i32 : i32, i32
  }
}

</mosaic_0001>

<llo_original>
// kernel: tpu_custom_call.1
$region0: #{tpu_custom_call.1}
  #allocation0 [shape = 'u32[]', space=smem, size = 0x4, offset = 0x4, fixed_abs, tag = 'smem constant byte address 0x4 - core index']
  #allocation1 [shape = 'u32[144,128]{1,0:T(1,128)}', space=vmem, size = 0x12000, scoped, tag = 'internal scratch']
  #allocation2 [shape = 's32[1]{0}', space=sflag, size = 0x4, scoped, tag = 'scoped memory for tpu_custom_call.1']
  #allocation3 [shape = 'u8[1024]{0}', space=smem, size = 0x400, scoped, tag = 'prefetched SMEM operand 0']
  %s0 = inlined_call_operand.hbm [shape: s32[2,8], index: 0, kind: input, shape index: {}]
  %s1 = inlined_call_operand.hbm [shape: f32[64,128], index: 1, kind: input, shape index: {}]
  %s2 = inlined_call_operand.hbm [shape: f32[2,128], index: 2, kind: output, shape index: {}]
  %s3 = sld [smem:[#allocation0]]
  $region25: #{tpu_custom_call.1} parent=0
    _
  %s5 = ssub.s32 1, %s3
  %s6 = scalar_select 0, %s5, %s3
  %8 = dma.hbm_to_smem %s0, 32, [#allocation3], [#allocation2]
  %9 = dma.done [#allocation2], 32
  %10 = sfence
  $region1: #{tpu_custom_call.1} parent=0
    #allocation4 [shape = 'u8[32768]{0}', space=vmem, size = 0x8000, scoped, tag = 'input window, operand 1, single buffered']
    #allocation5 [shape = 's32[1]{0}', space=sflag, size = 0x4, scoped, tag = 'scoped memory for tpu_custom_call.1']
    #allocation6 [shape = 's32[1]{0}', space=sflag, size = 0x4, scoped, tag = 'scoped memory for tpu_custom_call.1']
    #allocation7 [shape = 'u8[1024]{0}', space=vmem, size = 0x400, scoped, tag = 'output window, operand 0, single buffered']
    %11 = vsyncpa [#allocation5], 0
    %12 = vsyncpa [#allocation6], 0
    // Predicated region
    $region2: #{tpu_custom_call.1} parent=1 // pred_check
      _
    $region3: #{tpu_custom_call.1} parent=1 // pred_check_branch
      %14 = sbr.rel (0) target = $region5
    $region4: #{tpu_custom_call.1} parent=1 // pred_region
      %s16 = ssub.s32 1024, 1024
      %17 = vsyncadd [#allocation5], %s16
      %s18 = sshll.u32 [#allocation4], 4
      %s19 = int_to_ptr.vmem [resolvable:$true] %s18
      %24 = dma.hbm_to_vmem [thread:$0]  %s1, 1024, %s19, [#allocation5], 128, 128, 8
    $region5: #{tpu_custom_call.1} parent=1 // pred_fallthru
      _
    // Predicated region
    $region6: #{tpu_custom_call.1} parent=1 // pred_check
      _
    $region7: #{tpu_custom_call.1} parent=1 // pred_check_branch
      %26 = sbr.rel (0) target = $region9
    $region8: #{tpu_custom_call.1} parent=1 // pred_region
      %27 = dma.done [#allocation5], 1024
    $region9: #{tpu_custom_call.1} parent=1 // pred_fallthru
      _
    loop: start=0, step=1, limit=2
    $region10: #{tpu_custom_call.1} parent=1 // loop_pre_header
      _
    $region11: #{tpu_custom_call.1} parent=1 // loop_header
      %s29 = sphi 0, %s33
      %p30 = scmp.ge.s32.totalorder %s29, 2
    $region12: #{tpu_custom_call.1} parent=1 // loop_header_branch
      %32 = sbr.rel (%p30) target = $region16
    $region13: #{tpu_custom_call.1} parent=1 // loop_body
      %s34 = smul.u32 0, 2
      %s35 = sadd.s32 %s34, %s29
      %s36 = smul.u32 %s35, 128
      %s37 = sld [smem:[#allocation3 + %s36]]
      %s38 = scalar_lea.vmem [#allocation4], %s37
      %v39 = vld [vmem:[%s38] sm:$0x1]
      %s40 = sadd.s32 %s36, 1
      %s41 = sld [smem:[#allocation3 + %s40]]
      %s42 = scalar_lea.vmem [#allocation4], %s41
      %v43 = vld [vmem:[%s42] sm:$0x1]
      %v44 = vmax.f32 %v39, %v43
      %s45 = sadd.s32 %s36, 2
      %s46 = sld [smem:[#allocation3 + %s45]]
      %s47 = scalar_lea.vmem [#allocation4], %s46
      %v48 = vld [vmem:[%s47] sm:$0x1]
      %v49 = vmax.f32 %v44, %v48
      %s50 = sadd.s32 %s36, 3
      %s51 = sld [smem:[#allocation3 + %s50]]
      %s52 = scalar_lea.vmem [#allocation4], %s51
      %v53 = vld [vmem:[%s52] sm:$0x1]
      %v54 = vmax.f32 %v49, %v53
      %s55 = sadd.s32 %s36, 4
      %s56 = sld [smem:[#allocation3 + %s55]]
      %s57 = scalar_lea.vmem [#allocation4], %s56
      %v58 = vld [vmem:[%s57] sm:$0x1]
      %v59 = vmax.f32 %v54, %v58
      %s60 = sadd.s32 %s36, 5
      %s61 = sld [smem:[#allocation3 + %s60]]
      %s62 = scalar_lea.vmem [#allocation4], %s61
      %v63 = vld [vmem:[%s62] sm:$0x1]
      %v64 = vmax.f32 %v59, %v63
      %s65 = sadd.s32 %s36, 6
      %s66 = sld [smem:[#allocation3 + %s65]]
      %s67 = scalar_lea.vmem [#allocation4], %s66
      %v68 = vld [vmem:[%s67] sm:$0x1]
      %v69 = vmax.f32 %v64, %v68
      %s70 = sadd.s32 %s36, 7
      %s71 = sld [smem:[#allocation3 + %s70]]
      %s72 = scalar_lea.vmem [#allocation4], %s71
      %v73 = vld [vmem:[%s72] sm:$0x1]
      %v74 = vmax.f32 %v69, %v73
      %s75 = scalar_lea.vmem [#allocation7], %s29
      %76 = vst [vmem:[%s75] sm:$0x1] %v74
    $region14: #{tpu_custom_call.1} parent=1 // loop_footer
      %s33 = sadd.s32 1, %s29
    $region15: #{tpu_custom_call.1} parent=1 // loop_footer_branch
      %28 = sbr.rel target = $region11
    $region16: #{tpu_custom_call.1} parent=1 // loop_exit
      _
    // Predicated region
    $region17: #{tpu_custom_call.1} parent=1 // pred_check
      _
    $region18: #{tpu_custom_call.1} parent=1 // pred_check_branch
      %78 = sbr.rel (0) target = $region20
    $region19: #{tpu_custom_call.1} parent=1 // pred_region
      %s80 = ssub.s32 32, 32
      %81 = vsyncadd [#allocation6], %s80
      %s83 = sshll.u32 [#allocation7], 4
      %s84 = int_to_ptr.vmem [resolvable:$true] %s83
      %86 = dma.vmem_to_hbm [thread:$0]  %s84, 32, %s2, [#allocation6]
    $region20: #{tpu_custom_call.1} parent=1 // pred_fallthru
      _
    // Predicated region
    $region21: #{tpu_custom_call.1} parent=1 // pred_check
      _
    $region22: #{tpu_custom_call.1} parent=1 // pred_check_branch
      %88 = sbr.rel (0) target = $region24
    $region23: #{tpu_custom_call.1} parent=1 // pred_region
      %89 = dma.done [#allocation6], 32
    $region24: #{tpu_custom_call.1} parent=1 // pred_fallthru
      _
    %90 = vsyncpa [#allocation5], 1
    %91 = vsyncpa [#allocation6], 1

</llo_original>
